<compile_context>
chip_gen: v7x
topology: tpu7x:2x2x1
jax: 0.10.0
libtpu: 0.0.40
codegen_flags: <defaults>
</compile_context>

<pallas_src>
from functools import partial

import jax
import jax.numpy as jnp
from jax.experimental import pallas as pl
from jax.experimental.pallas import tpu as pltpu

EPS = 1e-5  # nn.InstanceNorm2d default eps


def unet_down_single_kernel(x_ref, w_ref, o_ref, *, wo, p, c8, inv_count):
    # x_ref: (Q, 8*Cin) bf16, Q=(Ho+1)*Wo;  w_ref: (16*Cin, Cpad) bf16;  o_ref: (P, Cpad)
    x0 = x_ref[pl.ds(0, p), :]                      # kh tap half 0
    x1 = x_ref[pl.ds(wo, p), :]                     # kh tap half 1 (row shift = Wo)
    y = jnp.dot(x0, w_ref[0:c8, :], preferred_element_type=jnp.float32)
    y = y + jnp.dot(x1, w_ref[c8:, :], preferred_element_type=jnp.float32)
    # One-pass InstanceNorm stats (f32) + ReLU.
    s = jnp.sum(y, axis=0, keepdims=True)
    sq = jnp.sum(y * y, axis=0, keepdims=True)
    mean = s * inv_count
    var = jnp.maximum(sq * inv_count - mean * mean, 0.0)
    y_n = (y - mean) * jax.lax.rsqrt(var + EPS)
    o_ref[...] = jnp.maximum(y_n, 0.0).astype(o_ref.dtype)


def unet_down_tiled_kernel(x_ref, w_ref, o_ref, sum_ref, sq_ref, *, wo, tp, c8, inv_count):
    # grid = (batch, sweep, tile).  sweep 0: accumulate per-channel sum / sumsq over tiles.
    #                               sweep 1: recompute conv tile, normalize + ReLU + store.
    sweep = pl.program_id(1)
    t = pl.program_id(2)

    base = t * tp
    if tp % 8 == 0:
        base = pl.multiple_of(base, 8)
    start1 = base + wo
    if tp % 8 == 0 and wo % 8 == 0:
        start1 = pl.multiple_of(start1, 8)

    x0 = x_ref[pl.ds(base, tp), :]
    x1 = x_ref[pl.ds(start1, tp), :]
    y = jnp.dot(x0, w_ref[0:c8, :], preferred_element_type=jnp.float32)
    y = y + jnp.dot(x1, w_ref[c8:, :], preferred_element_type=jnp.float32)

    @pl.when((sweep == 0) & (t == 0))
    def _init():
        sum_ref[...] = jnp.zeros_like(sum_ref)
        sq_ref[...] = jnp.zeros_like(sq_ref)

    @pl.when(sweep == 0)
    def _accumulate():
        sum_ref[...] += jnp.sum(y, axis=0, keepdims=True)
        sq_ref[...] += jnp.sum(y * y, axis=0, keepdims=True)

    @pl.when(sweep == 1)
    def _normalize():
        mean = sum_ref[...] * inv_count
        var = jnp.maximum(sq_ref[...] * inv_count - mean * mean, 0.0)
        y_n = (y - mean) * jax.lax.rsqrt(var + EPS)
        o_ref[...] = jnp.maximum(y_n, 0.0).astype(o_ref.dtype)


def _pick_block_rows(p, cpad, requested):
    """Spatial tile rows: divides P, multiple of 8 (or == P), ~2 MiB bf16 output tile."""
    if requested is not None:
        tp = int(requested)
        assert p % tp == 0, "block_rows must divide Ho*Wo"
        assert tp == p or tp % 8 == 0, "block_rows must be a multiple of 8 (or equal Ho*Wo)"
        return tp
    target = max(512, (2 << 20) // (cpad * 2))
    tp = p
    while tp > target and tp % 2 == 0 and (tp // 2) % 8 == 0:
        tp //= 2
    return tp


def unet_down(x_nchw, weight_oihw, *, block_rows=None, out_dtype=jnp.bfloat16):
    """x_nchw: (N, Cin, H, W); weight_oihw: (Cout, Cin, 4, 4). Returns NCHW `out_dtype`."""
    n, cin, h, w = x_nchw.shape
    cout = weight_oihw.shape[0]
    assert h % 2 == 0 and w % 2 == 0, "k=4/s=2/p=1 UNetDown expects even H, W"
    ho, wo = h // 2, w // 2
    hh, ww = ho + 1, wo + 1
    p = ho * wo                       # output pixels per instance
    q = hh * wo                       # space-to-depth rows per instance
    c4, c8, c16 = 4 * cin, 8 * cin, 16 * cin
    cpad = max(128, ((cout + 127) // 128) * 128)       # lane-dense output channels
    inv_count = 1.0 / float(p)

    # ---- input prep: space-to-depth + kw-overlap fold (~2x input bytes, all bf16) ----
    x_nhwc = jnp.transpose(x_nchw, (0, 2, 3, 1))
    xp = jnp.pad(x_nhwc, ((0, 0), (1, 1), (1, 1), (0, 0)))           # conv padding=1
    xs = xp.reshape(n, hh, 2, ww, 2, cin).transpose(0, 1, 3, 2, 4, 5).reshape(n, hh, ww, c4)
    xw = jnp.concatenate([xs[:, :, :wo, :], xs[:, :, 1:, :]], axis=-1)   # (N, Hh, Wo, 8Cin)
    xw = xw.reshape(n, q, c8).astype(jnp.bfloat16)

    # ---- weights: OIHW -> rows (di, dj, r, s, ci) x cols co, pad co -> cpad, bf16 ----
    wr = weight_oihw.reshape(cout, cin, 2, 2, 2, 2).transpose(2, 4, 3, 5, 1, 0)
    wr = wr.reshape(c16, cout)
    wr = jnp.pad(wr, ((0, 0), (0, cpad - cout))).astype(jnp.bfloat16)

    tp = _pick_block_rows(p, cpad, block_rows)
    n_tiles = p // tp

    out_itemsize = jnp.dtype(out_dtype).itemsize
    vmem_bytes = (2 * q * c8 * 2            # x resident (double-buffered)
                  + 2 * c16 * cpad * 2      # weights
                  + 2 * tp * cpad * out_itemsize   # output tile (double-buffered)
                  + 2 * tp * cpad * 4       # f32 conv tile temporaries
                  + (2 << 20))              # headroom
    vmem_limit = int(min(100 * 1024 * 1024, max(32 * 1024 * 1024, vmem_bytes)))

    out_shape = jax.ShapeDtypeStruct((n, p, cpad), out_dtype)

    if n_tiles == 1:
        kernel = partial(unet_down_single_kernel, wo=wo, p=p, c8=c8, inv_count=inv_count)
        out = pl.pallas_call(
            kernel,
            out_shape=out_shape,
            grid_spec=pltpu.PrefetchScalarGridSpec(
                num_scalar_prefetch=0,
                grid=(n,),
                in_specs=[
                    pl.BlockSpec((None, q, c8), lambda b: (b, 0, 0)),
                    pl.BlockSpec((c16, cpad), lambda b: (0, 0)),        # weights resident
                ],
                out_specs=pl.BlockSpec((None, p, cpad), lambda b: (b, 0, 0)),
            ),
            compiler_params=pltpu.CompilerParams(
                dimension_semantics=("parallel",),
                vmem_limit_bytes=vmem_limit),
        )(xw, wr)
    else:
        kernel = partial(unet_down_tiled_kernel, wo=wo, tp=tp, c8=c8, inv_count=inv_count)
        out = pl.pallas_call(
            kernel,
            out_shape=out_shape,
            grid_spec=pltpu.PrefetchScalarGridSpec(
                num_scalar_prefetch=0,
                grid=(n, 2, n_tiles),                       # (batch, sweep, spatial tile)
                in_specs=[
                    pl.BlockSpec((None, q, c8), lambda b, s, t: (b, 0, 0)),
                    pl.BlockSpec((c16, cpad), lambda b, s, t: (0, 0)),  # weights resident
                ],
                # sweep 0 pins the output buffer at block (b,0) and never writes it ->
                # the only HBM writebacks carry sweep-1 (normalized) data.
                out_specs=pl.BlockSpec((None, tp, cpad), lambda b, s, t: (b, t * s, 0)),
                scratch_shapes=[pltpu.VMEM((1, cpad), jnp.float32),     # per-channel sum
                                pltpu.VMEM((1, cpad), jnp.float32)],    # per-channel sumsq
            ),
            compiler_params=pltpu.CompilerParams(
                dimension_semantics=("parallel", "arbitrary", "arbitrary"),
                vmem_limit_bytes=vmem_limit),
        )(xw, wr)

    out = out[:, :, :cout].reshape(n, ho, wo, cout)        # drop padded channels, NHWC
    return jnp.transpose(out, (0, 3, 1, 2))                # back to NCHW


def _reference(x_nchw, weight_oihw):
    # pure-JAX reference (f32, exact conv) for sanity checking
    y = jax.lax.conv_general_dilated(
        x_nchw, weight_oihw, window_strides=(2, 2), padding=((1, 1), (1, 1)),
        dimension_numbers=("NCHW", "OIHW", "NCHW"),
        precision=jax.lax.Precision.HIGHEST)
    mean = jnp.mean(y, axis=(2, 3), keepdims=True)
    var = jnp.mean((y - mean) ** 2, axis=(2, 3), keepdims=True)
    return jnp.maximum((y - mean) * jax.lax.rsqrt(var + EPS), 0.0)


if __name__ == "__main__":
    # UNetDown(in_size=4, out_size=8), dropout=0.0 (default) -> no dropout layer
    N, CIN, COUT, H, W = 2, 4, 8, 16, 16

    key = jax.random.PRNGKey(0)
    kx, kw = jax.random.split(key)
    x = jax.random.normal(kx, (N, CIN, H, W), dtype=jnp.float32)
    weight = 0.1 * jax.random.normal(kw, (COUT, CIN, 4, 4), dtype=jnp.float32)

    # reference on the same bf16-rounded operands the kernel feeds the MXU
    xb = x.astype(jnp.bfloat16).astype(jnp.float32)
    wb = weight.astype(jnp.bfloat16).astype(jnp.float32)
    ref = _reference(xb, wb)

    # path A: whole spatial plane per grid step (fits VMEM at this size)
    out_a = jax.block_until_ready(unet_down(x, weight))
    # path B: spatially-tiled two-sweep InstanceNorm (2 tiles of 32 rows)
    out_b = jax.block_until_ready(unet_down(x, weight, block_rows=32))

    for out in (out_a, out_b):
        assert out.shape == (N, COUT, H // 2, W // 2)
        assert out.dtype == jnp.bfloat16
        err = float(jnp.max(jnp.abs(out.astype(jnp.float32) - ref)))
        assert err < 3e-2, err

    print("KERNEL_OK")
</pallas_src>

<mosaic_0001>
module attributes {stable_mosaic.version = 11 : i64} {
  func.func @unet_down_single_kernel(%arg0: i32, %arg1: memref<1x72x32xbf16, #tpu.memory_space<vmem>>, %arg2: memref<64x128xbf16, #tpu.memory_space<vmem>>, %arg3: memref<1x64x128xbf16, #tpu.memory_space<vmem>>) attributes {dimension_semantics = [#tpu.dimension_semantics<parallel>], iteration_bounds = array<i64: 2>, scalar_prefetch = 0 : i64, scratch_operands = 0 : i64, tpu.core_type = #tpu.core_type<tc>, window_params = [{transform_indices = @transform_0, window_bounds = array<i64: 1, 72, 32>}, {pipeline_mode = #tpu.pipeline_mode<synchronous>, transform_indices = @transform_1, window_bounds = array<i64: 64, 128>}, {transform_indices = @transform_2, window_bounds = array<i64: 1, 64, 128>}]} {
    %c0 = arith.constant 0 : index
    %c0_0 = arith.constant 0 : index
    %c0_1 = arith.constant 0 : index
    %0 = vector.load %arg1[%c0, %c0_0, %c0_1] : memref<1x72x32xbf16, #tpu.memory_space<vmem>>, vector<1x64x32xbf16>
    %1 = vector.shape_cast %0 : vector<1x64x32xbf16> to vector<64x32xbf16>
    %c0_2 = arith.constant 0 : index
    %c8 = arith.constant 8 : index
    %c0_3 = arith.constant 0 : index
    %2 = vector.load %arg1[%c0_2, %c8, %c0_3] : memref<1x72x32xbf16, #tpu.memory_space<vmem>>, vector<1x64x32xbf16>
    %3 = vector.shape_cast %2 : vector<1x64x32xbf16> to vector<64x32xbf16>
    %c0_4 = arith.constant 0 : index
    %c0_5 = arith.constant 0 : index
    %4 = vector.load %arg2[%c0_4, %c0_5] : memref<64x128xbf16, #tpu.memory_space<vmem>>, vector<32x128xbf16>
    %cst = arith.constant dense<0.000000e+00> : vector<64x128xf32>
    %5 = tpu.matmul %1, %4, %cst {dimension_numbers = #tpu.dot_dimension_numbers<[1], [0], [0], [1], [0, 0, 1, 1], [], []>} : vector<64x32xbf16>, vector<32x128xbf16>, vector<64x128xf32> -> vector<64x128xf32>
    %c32 = arith.constant 32 : index
    %c0_6 = arith.constant 0 : index
    %6 = vector.load %arg2[%c32, %c0_6] : memref<64x128xbf16, #tpu.memory_space<vmem>>, vector<32x128xbf16>
    %cst_7 = arith.constant dense<0.000000e+00> : vector<64x128xf32>
    %7 = tpu.matmul %3, %6, %cst_7 {dimension_numbers = #tpu.dot_dimension_numbers<[1], [0], [0], [1], [0, 0, 1, 1], [], []>} : vector<64x32xbf16>, vector<32x128xbf16>, vector<64x128xf32> -> vector<64x128xf32>
    %8 = arith.addf %5, %7 : vector<64x128xf32>
    %cst_8 = arith.constant dense<0.000000e+00> : vector<128xf32>
    %9 = vector.multi_reduction <add>, %8, %cst_8 [0] : vector<64x128xf32> to vector<128xf32>
    %10 = vector.shape_cast %9 : vector<128xf32> to vector<1x128xf32>
    %11 = arith.mulf %8, %8 : vector<64x128xf32>
    %cst_9 = arith.constant dense<0.000000e+00> : vector<128xf32>
    %12 = vector.multi_reduction <add>, %11, %cst_9 [0] : vector<64x128xf32> to vector<128xf32>
    %13 = vector.shape_cast %12 : vector<128xf32> to vector<1x128xf32>
    %cst_10 = arith.constant 1.562500e-02 : f32
    %14 = vector.broadcast %cst_10 : f32 to vector<1x128xf32>
    %15 = arith.mulf %10, %14 : vector<1x128xf32>
    %cst_11 = arith.constant 1.562500e-02 : f32
    %16 = vector.broadcast %cst_11 : f32 to vector<1x128xf32>
    %17 = arith.mulf %13, %16 : vector<1x128xf32>
    %18 = arith.mulf %15, %15 : vector<1x128xf32>
    %19 = arith.subf %17, %18 : vector<1x128xf32>
    %cst_12 = arith.constant 0.000000e+00 : f32
    %20 = vector.broadcast %cst_12 : f32 to vector<1x128xf32>
    %21 = arith.maximumf %19, %20 : vector<1x128xf32>
    %22 = vector.broadcast %15 : vector<1x128xf32> to vector<64x128xf32>
    %23 = arith.subf %8, %22 : vector<64x128xf32>
    %cst_13 = arith.constant 9.99999974E-6 : f32
    %24 = vector.broadcast %cst_13 : f32 to vector<1x128xf32>
    %25 = arith.addf %21, %24 : vector<1x128xf32>
    %26 = math.rsqrt %25 : vector<1x128xf32>
    %27 = vector.broadcast %26 : vector<1x128xf32> to vector<64x128xf32>
    %28 = arith.mulf %23, %27 : vector<64x128xf32>
    %cst_14 = arith.constant 0.000000e+00 : f32
    %29 = vector.broadcast %cst_14 : f32 to vector<64x128xf32>
    %30 = arith.maximumf %28, %29 : vector<64x128xf32>
    %31 = arith.truncf %30 : vector<64x128xf32> to vector<64x128xbf16>
    %c0_15 = arith.constant 0 : index
    %c0_16 = arith.constant 0 : index
    %c0_17 = arith.constant 0 : index
    %32 = vector.load %arg3[%c0_15, %c0_16, %c0_17] : memref<1x64x128xbf16, #tpu.memory_space<vmem>>, vector<1x64x128xbf16>
    %33 = vector.shape_cast %32 : vector<1x64x128xbf16> to vector<64x128xbf16>
    %34 = vector.shape_cast %31 : vector<64x128xbf16> to vector<1x64x128xbf16>
    tpu.vector_store %arg3[%c0_15, %c0_16, %c0_17], %34 {strides = array<i32>} : memref<1x64x128xbf16, #tpu.memory_space<vmem>>, vector<1x64x128xbf16>,
    return
  }
  func.func @transform_0(%arg0: i32) -> (i32, i32, i32) {
    %c0_i32 = arith.constant 0 : i32
    %c0_i32_0 = arith.constant 0 : i32
    %c0_i32_1 = arith.constant 0 : i32
    return %arg0, %c0_i32, %c0_i32_0 : i32, i32, i32
  }
  func.func @transform_1(%arg0: i32) -> (i32, i32) {
    %c0_i32 = arith.constant 0 : i32
    %c0_i32_0 = arith.constant 0 : i32
    %c0_i32_1 = arith.constant 0 : i32
    return %c0_i32, %c0_i32_0 : i32, i32
  }
  func.func @transform_2(%arg0: i32) -> (i32, i32, i32) {
    %c0_i32 = arith.constant 0 : i32
    %c0_i32_0 = arith.constant 0 : i32
    %c0_i32_1 = arith.constant 0 : i32
    return %arg0, %c0_i32, %c0_i32_0 : i32, i32, i32
  }
}

</mosaic_0001>

<llo_original>
// kernel: tpu_custom_call.1
$region0: #{tpu_custom_call.1}
  #allocation0 [shape = 'u32[]', space=smem, size = 0x4, offset = 0x4, fixed_abs, tag = 'smem constant byte address 0x4 - core index']
  #allocation1 [shape = 'u32[144,128]{1,0:T(1,128)}', space=vmem, size = 0x12000, scoped, tag = 'internal scratch']
  %s0 = inlined_call_operand.vmem [shape: bf16[2,72,32], index: 0, kind: input, shape index: {}]
  %s1 = inlined_call_operand.vmem [shape: bf16[64,128], index: 1, kind: input, shape index: {}]
  %s2 = inlined_call_operand.hbm [shape: bf16[2,64,128], index: 2, kind: output, shape index: {}]
  %s3 = sld [smem:[#allocation0]]
  $region41: #{tpu_custom_call.1} parent=0
    _
  %s5 = ssub.s32 1, %s3
  %s6 = scalar_select 0, %s5, %s3
  $region1: #{tpu_custom_call.1} parent=0
    #allocation2 [shape = 'u8[32768]{0}', space=vmem, size = 0x8000, scoped, tag = 'output window, operand 0']
    #allocation3 [shape = 's32[2]{0}', space=sflag, size = 0x8, scoped, tag = 'scoped memory for tpu_custom_call.1']
    %7 = vsyncpa [#allocation3], 0
    %s8 = scalar_lea.sflag [#allocation3], 1
    %9 = vsyncpa %s8, 0
    loop: start=0, step=1, limit=4
    $region2: #{tpu_custom_call.1} parent=1 // loop_pre_header
      _
    $region3: #{tpu_custom_call.1} parent=1 // loop_header
      %s11 = sphi 0, %s15
      %p12 = scmp.ge.s32.totalorder %s11, 4
      %s21 = sphi 0, %s23
      %s24 = sphi 0, %s21
      %s25 = sphi 0, %s24
      %s41 = sphi 0, %s25
      %s45 = sphi 0, %s45
      %s47 = sphi 0, %s45
      %s48 = sphi 0, %s47
      %s62 = sphi 0, %s48
      %s68 = sphi 0, %s70
      %s71 = sphi 0, %s68
      %s72 = sphi 0, %s71
      %s88 = sphi 0, %s72
    $region4: #{tpu_custom_call.1} parent=1 // loop_header_branch
      %14 = sbr.rel (%p12) target = $region8
    $region5: #{tpu_custom_call.1} parent=1 // loop_body
      %s16 = ssub.s32 %s11, 1
      %s17 = ssub.s32 %s11, 2
      %s18 = sadd.s32 %s11, 1
      %s19 = ssub.s32 %s11, %s18
      %p20 = scmp.eq.s32.totalorder %s19, 0
      %s22 = sadd.s32 %s21, 1
      %s23 = scalar_select %p20, %s21, %s22
      %p26 = pneg %p20
      %p27 = scmp.eq.s32.totalorder %s11, 1
      %p28 = por %p26, %p27
      %p29 = scmp.ne.s32.totalorder %s21, %s24
      %p30 = scmp.eq.s32.totalorder %s11, 0
      %p31 = por %p29, %p30
      %p32 = scmp.ne.s32.totalorder %s21, %s24
      %p33 = scmp.eq.s32.totalorder %s16, 1
      %p34 = por %p32, %p33
      %p35 = scmp.ne.s32.totalorder %s24, %s25
      %p36 = scmp.eq.s32.totalorder %s16, 0
      %p37 = por %p35, %p36
      %p38 = scmp.ne.s32.totalorder %s24, %s25
      %p39 = scmp.eq.s32.totalorder %s17, 1
      %p40 = por %p38, %p39
      %p42 = scmp.ne.s32.totalorder %s25, %s41
      %p43 = scmp.eq.s32.totalorder %s17, 0
      %p44 = por %p42, %p43
      %s46 = sadd.s32 %s45, 1
      %p49 = scmp.eq.s32.totalorder %s11, 1
      %p50 = scmp.ne.s32.totalorder %s45, %s47
      %p51 = scmp.eq.s32.totalorder %s11, 0
      %p52 = por %p50, %p51
      %p53 = scmp.ne.s32.totalorder %s45, %s47
      %p54 = scmp.eq.s32.totalorder %s16, 1
      %p55 = por %p53, %p54
      %p56 = scmp.ne.s32.totalorder %s47, %s48
      %p57 = scmp.eq.s32.totalorder %s16, 0
      %p58 = por %p56, %p57
      %p59 = scmp.ne.s32.totalorder %s47, %s48
      %p60 = scmp.eq.s32.totalorder %s17, 1
      %p61 = por %p59, %p60
      %p63 = scmp.ne.s32.totalorder %s48, %s62
      %p64 = scmp.eq.s32.totalorder %s17, 0
      %p65 = por %p63, %p64
      %s66 = ssub.s32 %s11, %s18
      %p67 = scmp.eq.s32.totalorder %s66, 0
      %s69 = sadd.s32 %s68, 1
      %s70 = scalar_select %p67, %s68, %s69
      %p73 = pneg %p67
      %p74 = scmp.eq.s32.totalorder %s11, 1
      %p75 = por %p73, %p74
      %p76 = scmp.ne.s32.totalorder %s68, %s71
      %p77 = scmp.eq.s32.totalorder %s11, 0
      %p78 = por %p76, %p77
      %p79 = scmp.ne.s32.totalorder %s68, %s71
      %p80 = scmp.eq.s32.totalorder %s16, 1
      %p81 = por %p79, %p80
      %p82 = scmp.ne.s32.totalorder %s71, %s72
      %p83 = scmp.eq.s32.totalorder %s16, 0
      %p84 = por %p82, %p83
      %p85 = scmp.ne.s32.totalorder %s71, %s72
      %p86 = scmp.eq.s32.totalorder %s17, 1
      %p87 = por %p85, %p86
      %p89 = scmp.ne.s32.totalorder %s72, %s88
      %p90 = scmp.eq.s32.totalorder %s17, 0
      %p91 = por %p89, %p90
      %p92 = scmp.le.s32.totalorder 1, %s11
      %p93 = scmp.lt.s32.totalorder %s11, 3
      %p94 = pnand %p92, %p93
      %p95 = pneg %p94
      // Predicated region
      $region9: #{tpu_custom_call.1} parent=5 // pred_check
        _
      $region10: #{tpu_custom_call.1} parent=5 // pred_check_branch
        %97 = sbr.rel (%p94) target = $region12
      $region11: #{tpu_custom_call.1} parent=5 // pred_region
        %s98 = ssub.s32 %s11, 1
        // Predicated region
        $region13: #{tpu_custom_call.1} parent=11 // pred_check
          %p99 = pneg %p58
        $region14: #{tpu_custom_call.1} parent=11 // pred_check_branch
          %101 = sbr.rel (%p99) target = $region16
        $region15: #{tpu_custom_call.1} parent=11 // pred_region
          _
        $region16: #{tpu_custom_call.1} parent=11 // pred_fallthru
          _
      $region12: #{tpu_custom_call.1} parent=5 // pred_fallthru
        _
      %p102 = scmp.lt.s32.totalorder %s11, 2
      // Predicated region
      $region17: #{tpu_custom_call.1} parent=5 // pred_check
        %p103 = pneg %p102
      $region18: #{tpu_custom_call.1} parent=5 // pred_check_branch
        %105 = sbr.rel (%p103) target = $region20
      $region19: #{tpu_custom_call.1} parent=5 // pred_region
        // Predicated region
        $region21: #{tpu_custom_call.1} parent=19 // pred_check
          %p106 = pneg %p31
        $region22: #{tpu_custom_call.1} parent=19 // pred_check_branch
          %108 = sbr.rel (%p106) target = $region24
        $region23: #{tpu_custom_call.1} parent=19 // pred_region
          %p109 = scmp.lt.s32.totalorder %s11, 1
          %s110 = scalar_select %p109, %s11, 1
          %s111 = smul.addr %s110, 9
          %s112 = smul.addr %s111, 4
          %s113 = scalar_lea.vmem %s0, %s112
        $region24: #{tpu_custom_call.1} parent=19 // pred_fallthru
          _
      $region20: #{tpu_custom_call.1} parent=5 // pred_fallthru
        _
      %p114 = scmp.le.s32.totalorder 1, %s11
      %p115 = scmp.lt.s32.totalorder %s11, 3
      %p116 = pnand %p114, %p115
      %p117 = pneg %p116
      // Predicated region
      $region25: #{tpu_custom_call.1} parent=5 // pred_check
        _
      $region26: #{tpu_custom_call.1} parent=5 // pred_check_branch
        %119 = sbr.rel (%p116) target = $region28
      $region27: #{tpu_custom_call.1} parent=5 // pred_region
        %s120 = ssub.s32 %s11, 1
        %p121 = scmp.lt.s32.totalorder %s16, 1
        %s122 = scalar_select %p121, %s16, 1
        %s123 = smul.addr %s122, 9
        %s124 = smul.addr %s123, 4
        %s125 = scalar_lea.vmem %s0, %s124
        %p126 = pneg %p37
        %p127 = pneg %p34
        %p128 = pneg %p58
        %p129 = pneg %p55
        %p130 = pneg %p84
        %p131 = pneg %p81
        %s132 = sand.u32 %s71, 1
        %s133 = scalar_lea.sflag [#allocation3], %s132
        %s134 = sand.u32 %s71, 1
        %s135 = smul.addr %s134, 32
        %s136 = scalar_lea.vmem [#allocation2], %s135
        %p137 = scmp.lt.s32.totalorder %s16, 1
        %s138 = scalar_select %p137, %s16, 1
        %s139 = smul.addr %s138, 9
        %s140 = smul.addr %s139, 4
        %s141 = scalar_lea.vmem %s0, %s140
        %v143 = vld [vmem:[%s141] sm:$0xf]
        %v144 = vld [vmem:[%s141 + $0x4] sm:$0xf]
        %v145 = vld [vmem:[%s141 + $0x8] sm:$0xf]
        %v146 = vld [vmem:[%s141 + $0xc] sm:$0xf]
        %v147 = vld [vmem:[%s141 + $0x10] sm:$0xf]
        %v148 = vld [vmem:[%s141 + $0x14] sm:$0xf]
        %v149 = vld [vmem:[%s141 + $0x18] sm:$0xf]
        %v150 = vld [vmem:[%s141 + $0x1c] sm:$0xf]
        %v151 = vld [vmem:[%s141 + $0x20] sm:$0xf]
        %v152 = vld [vmem:[%s1] sm:$0xf]
        %v153 = vld [vmem:[%s1 + $0x4] sm:$0xf]
        %v154 = vld [vmem:[%s1 + $0x8] sm:$0xf]
        %v155 = vld [vmem:[%s1 + $0xc] sm:$0xf]
        %v156 = vld [vmem:[%s1 + $0x10] sm:$0xf]
        %v157 = vld [vmem:[%s1 + $0x14] sm:$0xf]
        %v158 = vld [vmem:[%s1 + $0x18] sm:$0xf]
        %v159 = vld [vmem:[%s1 + $0x1c] sm:$0xf]
        %v168 = vunpack.c.l.b16 %v144
        %v169 = vunpack.c.l.b16 %v145
        %v170 = vunpack.c.l.b16 %v146
        %v171 = vunpack.c.l.b16 %v147
        %v172 = vunpack.c.l.b16 %v148
        %v173 = vunpack.c.l.b16 %v149
        %v174 = vunpack.c.l.b16 %v150
        %v175 = vunpack.c.l.b16 %v151
        %v176 = vpack.c.b16 %v169, %v168
        %v177 = vpack.c.b16 %v171, %v170
        %v178 = vpack.c.b16 %v173, %v172
        %v179 = vpack.c.b16 %v175, %v174
        %v184 = vunpack.c.l.b16 %v156
        %v185 = vunpack.c.l.b16 %v157
        %v186 = vunpack.c.l.b16 %v158
        %v187 = vunpack.c.l.b16 %v159
        %v188 = vpack.c.b16 %v185, %v184
        %v189 = vpack.c.b16 %v187, %v186
        %vm192 = vcmask 261120
        %v194 = vsel %vm192, %v176, 0
        %v197 = vsel %vm192, %v177, 0
        %v200 = vsel %vm192, %v178, 0
        %v203 = vsel %vm192, %v179, 0
        %205 = vmatprep.subr.bf16.mxu0 0
        %206 = vmatpush1.bf16.msra.mxu0 %v188
        %207 = vmatprep.subr.bf16.mxu0 0
        %208 = vmatpush1.bf16.msra.mxu0 %v189
        %209 = vmatprep.subr.bf16.mxu0 0
        %210 = vmatpush1.bf16.msra.mxu0 0
        %211 = vmatprep.subr.bf16.mxu0 0
        %212 = vmatpush1.bf16.msra.mxu0 0
        %213 = vmatprep.subr.bf16.mxu0 0
        %214 = vmatpush1.bf16.msra.mxu0 0
        %215 = vmatprep.subr.bf16.mxu0 0
        %216 = vmatpush1.bf16.msra.mxu0 0
        %217 = vmatprep.subr.bf16.mxu0 0
        %218 = vmatpush1.bf16.msra.mxu0 0
        %219 = vmatprep.subr.bf16.mxu0 0
        %220 = vmatpush1.bf16.msra.mxu0 0
        %221 = vmatprep.subr.bf16.mxu0 0
        %222 = vmatpush1.bf16.msra.mxu0 0
        %223 = vmatprep.subr.bf16.mxu0 0
        %224 = vmatpush1.bf16.msra.mxu0 0
        %225 = vmatprep.subr.bf16.mxu0 0
        %226 = vmatpush1.bf16.msra.mxu0 0
        %227 = vmatprep.subr.bf16.mxu0 0
        %228 = vmatpush1.bf16.msra.mxu0 0
        %229 = vmatprep.subr.bf16.mxu0 0
        %230 = vmatpush1.bf16.msra.mxu0 0
        %231 = vmatprep.subr.bf16.mxu0 0
        %232 = vmatpush1.bf16.msra.mxu0 0
        %233 = vmatprep.subr.bf16.mxu0 0
        %234 = vmatpush1.bf16.msra.mxu0 0
        %235 = vmatprep.subr.bf16.mxu0 0
        %236 = vmatpush1.bf16.msra.mxu0 0
        %237 = vmatprep.mubr.bf16.mxu0 0
        %238 = vmatmul.mubr.bf16.gmra.mrb[0].mxu0 %v194
        %v239 = vpop.f32.mrb[0].mxu0
        %v240 = vadd.f32 0.0, %v239
        %v241 = vpop.f32.mrb[0].mxu0
        %v242 = vpop.f32.mrb[0].mxu0
        %v243 = vadd.f32 0.0, %v242
        %v244 = vpop.f32.mrb[0].mxu0
        %245 = vmatprep.mubr.bf16.mxu0 0
        %246 = vmatmul.mubr.bf16.gmra.mrb[0].mxu0 %v197
        %v247 = vpop.f32.mrb[0].mxu0
        %v248 = vadd.f32 0.0, %v247
        %v249 = vpop.f32.mrb[0].mxu0
        %v250 = vpop.f32.mrb[0].mxu0
        %v251 = vadd.f32 0.0, %v250
        %v252 = vpop.f32.mrb[0].mxu0
        %253 = vmatprep.mubr.bf16.mxu0 0
        %254 = vmatmul.mubr.bf16.gmra.mrb[0].mxu0 %v200
        %v255 = vpop.f32.mrb[0].mxu0
        %v256 = vadd.f32 0.0, %v255
        %v257 = vpop.f32.mrb[0].mxu0
        %v258 = vpop.f32.mrb[0].mxu0
        %v259 = vadd.f32 0.0, %v258
        %v260 = vpop.f32.mrb[0].mxu0
        %261 = vmatprep.mubr.bf16.mxu0 0
        %262 = vmatmul.mubr.bf16.gmra.mrb[0].mxu0 %v203
        %v263 = vpop.f32.mrb[0].mxu0
        %v264 = vadd.f32 0.0, %v263
        %v265 = vpop.f32.mrb[0].mxu0
        %v266 = vpop.f32.mrb[0].mxu0
        %v267 = vadd.f32 0.0, %v266
        %v268 = vpop.f32.mrb[0].mxu0
        %269 = vdwg.mxu0
        %v271 = vunpack.c.l.b16 %v143
        %v272 = vpack.c.b16 %v168, %v271
        %v273 = vpack.c.b16 %v170, %v169
        %v274 = vpack.c.b16 %v172, %v171
        %v275 = vpack.c.b16 %v174, %v173
        %v280 = vunpack.c.l.b16 %v152
        %v281 = vunpack.c.l.b16 %v153
        %v282 = vunpack.c.l.b16 %v154
        %v283 = vunpack.c.l.b16 %v155
        %v284 = vpack.c.b16 %v281, %v280
        %v285 = vpack.c.b16 %v283, %v282
        %v289 = vsel %vm192, %v272, 0
        %v292 = vsel %vm192, %v273, 0
        %v295 = vsel %vm192, %v274, 0
        %v298 = vsel %vm192, %v275, 0
        %300 = vmatprep.subr.bf16.mxu0 0
        %301 = vmatpush1.bf16.msra.mxu0 %v284
        %302 = vmatprep.subr.bf16.mxu0 0
        %303 = vmatpush1.bf16.msra.mxu0 %v285
        %304 = vmatprep.subr.bf16.mxu0 0
        %305 = vmatpush1.bf16.msra.mxu0 0
        %306 = vmatprep.subr.bf16.mxu0 0
        %307 = vmatpush1.bf16.msra.mxu0 0
        %308 = vmatprep.subr.bf16.mxu0 0
        %309 = vmatpush1.bf16.msra.mxu0 0
        %310 = vmatprep.subr.bf16.mxu0 0
        %311 = vmatpush1.bf16.msra.mxu0 0
        %312 = vmatprep.subr.bf16.mxu0 0
        %313 = vmatpush1.bf16.msra.mxu0 0
        %314 = vmatprep.subr.bf16.mxu0 0
        %315 = vmatpush1.bf16.msra.mxu0 0
        %316 = vmatprep.subr.bf16.mxu0 0
        %317 = vmatpush1.bf16.msra.mxu0 0
        %318 = vmatprep.subr.bf16.mxu0 0
        %319 = vmatpush1.bf16.msra.mxu0 0
        %320 = vmatprep.subr.bf16.mxu0 0
        %321 = vmatpush1.bf16.msra.mxu0 0
        %322 = vmatprep.subr.bf16.mxu0 0
        %323 = vmatpush1.bf16.msra.mxu0 0
        %324 = vmatprep.subr.bf16.mxu0 0
        %325 = vmatpush1.bf16.msra.mxu0 0
        %326 = vmatprep.subr.bf16.mxu0 0
        %327 = vmatpush1.bf16.msra.mxu0 0
        %328 = vmatprep.subr.bf16.mxu0 0
        %329 = vmatpush1.bf16.msra.mxu0 0
        %330 = vmatprep.subr.bf16.mxu0 0
        %331 = vmatpush1.bf16.msra.mxu0 0
        %332 = vmatprep.mubr.bf16.mxu0 0
        %333 = vmatmul.mubr.bf16.gmra.mrb[0].mxu0 %v289
        %v334 = vpop.f32.mrb[0].mxu0
        %v335 = vadd.f32 %v240, %v334
        %v336 = vpop.f32.mrb[0].mxu0
        %v337 = vpop.f32.mrb[0].mxu0
        %v338 = vadd.f32 %v243, %v337
        %v339 = vpop.f32.mrb[0].mxu0
        %340 = vmatprep.mubr.bf16.mxu0 0
        %341 = vmatmul.mubr.bf16.gmra.mrb[0].mxu0 %v292
        %v342 = vpop.f32.mrb[0].mxu0
        %v343 = vadd.f32 %v248, %v342
        %v344 = vpop.f32.mrb[0].mxu0
        %v345 = vpop.f32.mrb[0].mxu0
        %v346 = vadd.f32 %v251, %v345
        %v347 = vpop.f32.mrb[0].mxu0
        %348 = vmatprep.mubr.bf16.mxu0 0
        %349 = vmatmul.mubr.bf16.gmra.mrb[0].mxu0 %v295
        %v350 = vpop.f32.mrb[0].mxu0
        %v351 = vadd.f32 %v256, %v350
        %v352 = vpop.f32.mrb[0].mxu0
        %v353 = vpop.f32.mrb[0].mxu0
        %v354 = vadd.f32 %v259, %v353
        %v355 = vpop.f32.mrb[0].mxu0
        %356 = vmatprep.mubr.bf16.mxu0 0
        %357 = vmatmul.mubr.bf16.gmra.mrb[0].mxu0 %v298
        %v358 = vpop.f32.mrb[0].mxu0
        %v359 = vadd.f32 %v264, %v358
        %v360 = vpop.f32.mrb[0].mxu0
        %v361 = vpop.f32.mrb[0].mxu0
        %v362 = vadd.f32 %v267, %v361
        %v363 = vpop.f32.mrb[0].mxu0
        %364 = vdwg.mxu0
        %v365 = vadd.f32 %v335, %v338
        %v366 = vadd.f32 %v365, %v343
        %v367 = vadd.f32 %v366, %v346
        %v368 = vadd.f32 %v367, %v351
        %v369 = vadd.f32 %v368, %v354
        %v370 = vadd.f32 %v369, %v359
        %v371 = vadd.f32 %v370, %v362
        %v372 = vrot.slane %v371, 4
        %v373 = vadd.f32 %v371, %v372
        %v374 = vrot.slane %v373, 2
        %v375 = vadd.f32 %v373, %v374
        %v376 = vrot.slane %v375, 1
        %v377 = vadd.f32 %v375, %v376
        %v378 = vmul.f32 %v335, %v335
        %v379 = vmul.f32 %v338, %v338
        %v380 = vmul.f32 %v343, %v343
        %v381 = vmul.f32 %v346, %v346
        %v382 = vmul.f32 %v351, %v351
        %v383 = vmul.f32 %v354, %v354
        %v384 = vmul.f32 %v359, %v359
        %v385 = vmul.f32 %v362, %v362
        %v386 = vadd.f32 %v378, %v379
        %v387 = vadd.f32 %v386, %v380
        %v388 = vadd.f32 %v387, %v381
        %v389 = vadd.f32 %v388, %v382
        %v390 = vadd.f32 %v389, %v383
        %v391 = vadd.f32 %v390, %v384
        %v392 = vadd.f32 %v391, %v385
        %v393 = vrot.slane %v392, 4
        %v394 = vadd.f32 %v392, %v393
        %v395 = vrot.slane %v394, 2
        %v396 = vadd.f32 %v394, %v395
        %v397 = vrot.slane %v396, 1
        %v398 = vadd.f32 %v396, %v397
        %v399 = vmul.f32 %v377, 0.015625
        %v400 = vmul.f32 %v398, 0.015625
        %v401 = vmul.f32 %v399, %v399
        %v402 = vsub.f32 %v400, %v401
        %v403 = vmax.f32 %v402, 0.0
        %v404 = vsub.f32 %v335, %v399
        %v405 = vsub.f32 %v338, %v399
        %v406 = vsub.f32 %v343, %v399
        %v407 = vsub.f32 %v346, %v399
        %v408 = vsub.f32 %v351, %v399
        %v409 = vsub.f32 %v354, %v399
        %v410 = vsub.f32 %v359, %v399
        %v411 = vsub.f32 %v362, %v399
        %v412 = vadd.f32 %v403, 1e-05
        %v413 = vrsqrt.pop %v412
        %v414 = vmul.f32 %v404, %v413
        %v415 = vmul.f32 %v405, %v413
        %v416 = vmul.f32 %v406, %v413
        %v417 = vmul.f32 %v407, %v413
        %v418 = vmul.f32 %v408, %v413
        %v419 = vmul.f32 %v409, %v413
        %v420 = vmul.f32 %v410, %v413
        %v421 = vmul.f32 %v411, %v413
        %v422 = vmax.f32 %v414, 0.0
        %v423 = vmax.f32 %v415, 0.0
        %v424 = vmax.f32 %v416, 0.0
        %v425 = vmax.f32 %v417, 0.0
        %v426 = vmax.f32 %v418, 0.0
        %v427 = vmax.f32 %v419, 0.0
        %v428 = vmax.f32 %v420, 0.0
        %v429 = vmax.f32 %v421, 0.0
        %v430 = vpack.c.bf16 %v423, %v422
        %v431 = vpack.c.bf16 %v425, %v424
        %v432 = vpack.c.bf16 %v427, %v426
        %v433 = vpack.c.bf16 %v429, %v428
        %v438 = vunpack.c.l.b16 %v430
        %v439 = vunpack.c.h.b16 %v430
        %v440 = vunpack.c.l.b16 %v431
        %v441 = vunpack.c.h.b16 %v431
        %v442 = vunpack.c.l.b16 %v432
        %v443 = vunpack.c.h.b16 %v432
        %v444 = vunpack.c.l.b16 %v433
        %v445 = vunpack.c.h.b16 %v433
        %v446 = vpack.c.b16 %v438, %v438
        %v447 = vpack.c.b16 %v439, %v439
        %v448 = vpack.c.b16 %v440, %v440
        %v449 = vpack.c.b16 %v441, %v441
        %v450 = vpack.c.b16 %v442, %v442
        %v451 = vpack.c.b16 %v443, %v443
        %v452 = vpack.c.b16 %v444, %v444
        %v453 = vpack.c.b16 %v445, %v445
        %462 = vst [vmem:[%s136] sm:$0xf] %v446
        %463 = vst [vmem:[%s136 + $0x4] sm:$0xf] %v447
        %464 = vst [vmem:[%s136 + $0x8] sm:$0xf] %v448
        %465 = vst [vmem:[%s136 + $0xc] sm:$0xf] %v449
        %466 = vst [vmem:[%s136 + $0x10] sm:$0xf] %v450
        %467 = vst [vmem:[%s136 + $0x14] sm:$0xf] %v451
        %468 = vst [vmem:[%s136 + $0x18] sm:$0xf] %v452
        %469 = vst [vmem:[%s136 + $0x1c] sm:$0xf] %v453
        %s470 = sand.u32 %s71, 1
        %s471 = scalar_lea.sflag [#allocation3], %s470
        %s472 = sand.u32 %s71, 1
        %s473 = smul.addr %s472, 32
        %s474 = scalar_lea.vmem [#allocation2], %s473
        // Predicated region
        $region29: #{tpu_custom_call.1} parent=27 // pred_check
          %p475 = pneg %p81
        $region30: #{tpu_custom_call.1} parent=27 // pred_check_branch
          %477 = sbr.rel (%p475) target = $region32
        $region31: #{tpu_custom_call.1} parent=27 // pred_region
          %s479 = ssub.s32 512, 512
          %480 = vsyncadd %s471, %s479
          %s481 = smul.addr %s16, 8
          %s482 = smul.addr %s481, 64
          %s483 = scalar_lea.hbm %s2, %s482
          %s484 = sshll.u32 %s474, 4
          %s485 = int_to_ptr.vmem [resolvable:$true] %s484
          %490 = dma.vmem_to_hbm [thread:$0]  %s485, 512, %s483, %s471, 64, 64, 4
        $region32: #{tpu_custom_call.1} parent=27 // pred_fallthru
          _
      $region28: #{tpu_custom_call.1} parent=5 // pred_fallthru
        _
      %p491 = scmp.le.s32.totalorder 2, %s11
      // Predicated region
      $region33: #{tpu_custom_call.1} parent=5 // pred_check
        %p492 = pneg %p491
      $region34: #{tpu_custom_call.1} parent=5 // pred_check_branch
        %494 = sbr.rel (%p492) target = $region36
      $region35: #{tpu_custom_call.1} parent=5 // pred_region
        %s495 = ssub.s32 %s11, 2
        // Predicated region
        $region37: #{tpu_custom_call.1} parent=35 // pred_check
          %p496 = pneg %p87
        $region38: #{tpu_custom_call.1} parent=35 // pred_check_branch
          %498 = sbr.rel (%p496) target = $region40
        $region39: #{tpu_custom_call.1} parent=35 // pred_region
          %s499 = sand.u32 %s72, 1
          %s500 = scalar_lea.sflag [#allocation3], %s499
          %s501 = sand.u32 %s72, 1
          %s502 = smul.addr %s501, 32
          %s503 = scalar_lea.vmem [#allocation2], %s502
          %504 = dma.done %s500, 512
        $region40: #{tpu_custom_call.1} parent=35 // pred_fallthru
          _
      $region36: #{tpu_custom_call.1} parent=5 // pred_fallthru
        _
    $region6: #{tpu_custom_call.1} parent=1 // loop_footer
      %s15 = sadd.s32 1, %s11
    $region7: #{tpu_custom_call.1} parent=1 // loop_footer_branch
      %10 = sbr.rel target = $region3
    $region8: #{tpu_custom_call.1} parent=1 // loop_exit
      _
    %505 = vsyncpa [#allocation3], 1
    %s506 = scalar_lea.sflag [#allocation3], 1
    %507 = vsyncpa %s506, 1

</llo_original>
